<compile_context>
chip_gen: v6e
topology: v6e:2x2x1
jax: 0.10.0
libtpu: 0.0.40
codegen_flags: <defaults>
</compile_context>

<pallas_src>
import functools

import jax
import jax.numpy as jnp
from jax import lax
from jax.experimental import pallas as pl
from jax.experimental.pallas import tpu as pltpu

LN_EPS = 1e-5                          # PyTorch nn.LayerNorm default
_MAX_TOKEN_TILE = 16384                # feedback: grow past the old 2048 cap
_VMEM_TILE_BUDGET = 16 * 1024 * 1024   # conservative across v5e/v6e/v7x


# --------------------------------------------------------------------------- #
# Kernel
# --------------------------------------------------------------------------- #
def _patch_embed_kernel(p_ref, w_ref, params_ref, o_ref):
    # p_ref:      (tm, K)        bf16 patch tile       (K = C * patch * patch)
    # w_ref:      (K, d_model)   bf16 projection weight (resident across grid)
    # params_ref: (8, d_model)   f32: row0 = bias, row1 = gamma, row2 = beta
    # o_ref:      (tm, d_model)  output tile (bf16 by default)
    y = jnp.dot(p_ref[...], w_ref[...], preferred_element_type=jnp.float32)

    params = params_ref[...]
    bias = params[0:1, :]
    gamma = params[1:2, :]
    beta = params[2:3, :]

    y = y + bias
    # LayerNorm over d_model using raw moments (biased variance = PyTorch
    # default).  Both reductions issue directly off the matmul result; the
    # affine is folded into a single scale/shift.
    mean = jnp.mean(y, axis=-1, keepdims=True)
    msq = jnp.mean(y * y, axis=-1, keepdims=True)
    inv = lax.rsqrt(msq - mean * mean + LN_EPS)
    scale = gamma * inv                         # (tm, d_model)
    shift = beta - mean * scale                 # (tm, d_model)
    o_ref[...] = (y * scale + shift).astype(o_ref.dtype)


# --------------------------------------------------------------------------- #
# Tile selection helpers
# --------------------------------------------------------------------------- #
def _num_tensorcores_per_chip():
    """Best-effort TensorCore count (2 on v7x, 1 on v5e/v6e).  Defaults to 2 so
    grids stay evenly splittable on megacore parts; the cost of that choice on
    single-core chips is at most one extra grid step."""
    try:
        info = pltpu.get_tpu_info()
        for name in ("num_cores", "num_tensorcores", "tensorcores_per_chip",
                     "core_count"):
            n = getattr(info, name, None)
            if isinstance(n, int) and n > 0:
                return n
    except Exception:
        pass
    try:
        n = getattr(jax.devices()[0], "num_cores", None)
        if isinstance(n, int) and n > 0:
            return n
    except Exception:
        pass
    return 2


def _divisors(n):
    ds = set()
    i = 1
    while i * i <= n:
        if n % i == 0:
            ds.add(i)
            ds.add(n // i)
        i += 1
    return ds


def _choose_token_tile(M, K, d_model, in_itemsize, out_itemsize,
                       vmem_budget, num_cores):
    """Pick the token tile tm.

    Preference order: tm divides M (no tail -> no padding copy), the grid splits
    evenly across the detected TensorCores, tm is as large as possible (fewer
    ~0.35 us grid steps).  Valid tiles must satisfy the Mosaic (8,128) block
    rule on the second-to-last dim: tm % 8 == 0 or tm == M.
    Returns (tm, needs_pad)."""
    resident = 2 * (K * d_model * in_itemsize + 8 * d_model * 4)

    def fits(tm):
        streamed = 2 * tm * (K * in_itemsize + d_model * out_itemsize)
        return streamed + resident <= vmem_budget

    cands = [d for d in _divisors(M)
             if d <= _MAX_TOKEN_TILE and (d % 8 == 0 or d == M) and fits(d)]
    if cands:
        def score(tm):
            g = M // tm
            even_split = (num_cores <= 1) or (g % num_cores == 0)
            enough_steps = g >= num_cores
            return (even_split, enough_steps, tm)
        return max(cands, key=score), False

    # Rare fallback (M has no suitable divisor that fits): padded tail.
    for cand in (16384, 8192, 4096, 2048, 1024, 512, 256, 128, 64, 32, 16, 8):
        if cand <= max(M, 8) and fits(cand):
            assert fits(cand), "projection weight does not fit the VMEM budget"
            return cand, True
    raise ValueError("PatchEmbedding: (K, d_model) weight does not fit the "
                     "VMEM tile budget; reduce d_model or raise the budget.")


# --------------------------------------------------------------------------- #
# Public entry point
# --------------------------------------------------------------------------- #
def patch_embedding(x, proj_w, proj_b, ln_gamma, ln_beta, *,
                    patch_size,
                    compute_dtype=jnp.bfloat16,
                    out_dtype=jnp.bfloat16):
    """
    Args:
      x:        (B, C, H, W)  NCHW image
      proj_w:   (d_model, C, patch, patch)   Conv2d weight
      proj_b:   (d_model,)                   Conv2d bias
      ln_gamma: (d_model,)                   LayerNorm weight
      ln_beta:  (d_model,)                   LayerNorm bias
    Returns:
      (B, num_patches, d_model) in out_dtype (bf16 by default; downstream Swin
      blocks run in bf16 - pass out_dtype=jnp.float32 for exact-width output).
    """
    B, C, H, W = x.shape
    p = patch_size
    hp, wp = H // p, W // p
    num_patches = hp * wp
    d_model = proj_w.shape[0]
    K = C * p * p
    M = B * num_patches

    # --- glue: patch extraction + bf16 cast in ONE fused XLA relayout pass ---
    # (B, C, hp, p, wp, p) -> (B, hp, wp, C, p, p) -> (M, K); row-major over
    # (hp, wp) matches Conv2d(stride=p).flatten(2).transpose(1, 2).
    patches = x.reshape(B, C, hp, p, wp, p)
    patches = jnp.transpose(patches, (0, 2, 4, 1, 3, 5)).reshape(M, K)
    patches = patches.astype(compute_dtype)

    # Conv kernel as a dense projection: (d_model, C, p, p) -> (K, d_model).
    w_mat = proj_w.reshape(d_model, K).T.astype(compute_dtype)

    # bias / gamma / beta packed into a single sublane-padded f32 operand
    # (one resident DMA instead of three).
    params = jnp.zeros((8, d_model), jnp.float32)
    params = params.at[0].set(proj_b.astype(jnp.float32))
    params = params.at[1].set(ln_gamma.astype(jnp.float32))
    params = params.at[2].set(ln_beta.astype(jnp.float32))

    num_cores = _num_tensorcores_per_chip()
    tm, needs_pad = _choose_token_tile(
        M, K, d_model,
        jnp.dtype(compute_dtype).itemsize,
        jnp.dtype(out_dtype).itemsize,
        _VMEM_TILE_BUDGET, num_cores)

    if needs_pad:
        m_pad = pl.cdiv(M, tm) * tm
        patches = jnp.pad(patches, ((0, m_pad - M), (0, 0)))
    else:
        m_pad = M
    grid_m = m_pad // tm

    out = pl.pallas_call(
        _patch_embed_kernel,
        out_shape=jax.ShapeDtypeStruct((m_pad, d_model), out_dtype),
        grid_spec=pltpu.PrefetchScalarGridSpec(
            num_scalar_prefetch=0,
            grid=(grid_m,),
            in_specs=[
                pl.BlockSpec((tm, K), lambda i: (i, 0)),
                pl.BlockSpec((K, d_model), lambda i: (0, 0)),
                pl.BlockSpec((8, d_model), lambda i: (0, 0)),
            ],
            out_specs=pl.BlockSpec((tm, d_model), lambda i: (i, 0)),
        ),
        compiler_params=pltpu.CompilerParams(
            dimension_semantics=("parallel",),
            vmem_limit_bytes=32 * 1024 * 1024,
        ),
    )(patches, w_mat, params)

    if needs_pad:
        out = out[:M]
    return out.reshape(B, num_patches, d_model)


# --------------------------------------------------------------------------- #
# Pure-JAX references (for the correctness checks below)
# --------------------------------------------------------------------------- #
def _reference_f32(x, proj_w, proj_b, ln_gamma, ln_beta, *, patch_size):
    """Full-f32 mirror of the PyTorch forward."""
    y = lax.conv_general_dilated(
        x, proj_w,
        window_strides=(patch_size, patch_size),
        padding="VALID",
        dimension_numbers=("NCHW", "OIHW", "NCHW"),
    ) + proj_b[None, :, None, None]
    B, D, hp, wp = y.shape
    y = y.reshape(B, D, hp * wp).transpose(0, 2, 1)   # (B, num_patches, d_model)
    mean = jnp.mean(y, axis=-1, keepdims=True)
    var = jnp.mean((y - mean) ** 2, axis=-1, keepdims=True)
    return (y - mean) / jnp.sqrt(var + LN_EPS) * ln_gamma + ln_beta


def _reference_quantized(x, proj_w, proj_b, ln_gamma, ln_beta, *,
                         patch_size, compute_dtype):
    """Mirror of exactly what the kernel computes before the final output cast
    (bf16 matmul operands, f32 accumulation + bias + LayerNorm)."""
    B, C, H, W = x.shape
    p = patch_size
    hp, wp = H // p, W // p
    d_model = proj_w.shape[0]
    K = C * p * p
    patches = jnp.transpose(x.reshape(B, C, hp, p, wp, p),
                            (0, 2, 4, 1, 3, 5)).reshape(B * hp * wp, K)
    patches = patches.astype(compute_dtype).astype(jnp.float32)
    w = proj_w.reshape(d_model, K).T.astype(compute_dtype).astype(jnp.float32)
    y = patches @ w + proj_b[None, :]
    mean = jnp.mean(y, axis=-1, keepdims=True)
    var = jnp.mean((y - mean) ** 2, axis=-1, keepdims=True)
    out = (y - mean) * lax.rsqrt(var + LN_EPS) * ln_gamma + ln_beta
    return out.reshape(B, hp * wp, d_model)


# --------------------------------------------------------------------------- #
# Self-test
# --------------------------------------------------------------------------- #
if __name__ == "__main__":
    img_size = 16
    patch_size = 4
    in_channels = 4
    d_model = 32
    batch = 2

    key = jax.random.PRNGKey(0)
    kx, kw, kb = jax.random.split(key, 3)

    x = jax.random.normal(kx, (batch, in_channels, img_size, img_size),
                          dtype=jnp.float32)
    proj_w = 0.05 * jax.random.normal(
        kw, (d_model, in_channels, patch_size, patch_size), dtype=jnp.float32)
    proj_b = 0.01 * jax.random.normal(kb, (d_model,), dtype=jnp.float32)
    ln_gamma = jnp.ones((d_model,), dtype=jnp.float32)
    ln_beta = jnp.zeros((d_model,), dtype=jnp.float32)

    fn = jax.jit(functools.partial(patch_embedding, patch_size=patch_size))
    out = jax.block_until_ready(fn(x, proj_w, proj_b, ln_gamma, ln_beta))

    assert out.shape == (batch, (img_size // patch_size) ** 2, d_model)
    assert out.dtype == jnp.bfloat16
    outf = out.astype(jnp.float32)

    # Tight check vs a pure-JAX model of exactly what the kernel computes
    # (bf16 operands, f32 accumulation/LayerNorm); slack covers the bf16
    # rounding of the kernel's output stream.
    ref_q = _reference_quantized(x, proj_w, proj_b, ln_gamma, ln_beta,
                                 patch_size=patch_size,
                                 compute_dtype=jnp.bfloat16)
    assert jnp.allclose(outf, ref_q, atol=3e-2, rtol=3e-2), \
        "mismatch vs quantized reference"

    # Loose sanity check vs the full-f32 PyTorch-equivalent forward
    # (difference = bf16 rounding of matmul operands + bf16 output).
    ref = _reference_f32(x, proj_w, proj_b, ln_gamma, ln_beta,
                         patch_size=patch_size)
    assert jnp.allclose(outf, ref, atol=8e-2, rtol=8e-2), \
        "mismatch vs f32 reference"

    print("KERNEL_OK")
</pallas_src>

<mosaic_0001>
module attributes {stable_mosaic.version = 11 : i64} {
  func.func @_patch_embed_kernel(%arg0: i32, %arg1: memref<16x64xbf16, #tpu.memory_space<vmem>>, %arg2: memref<64x32xbf16, #tpu.memory_space<vmem>>, %arg3: memref<8x32xf32, #tpu.memory_space<vmem>>, %arg4: memref<16x32xbf16, #tpu.memory_space<vmem>>) attributes {dimension_semantics = [#tpu.dimension_semantics<parallel>], iteration_bounds = array<i64: 2>, scalar_prefetch = 0 : i64, scratch_operands = 0 : i64, tpu.core_type = #tpu.core_type<tc>, window_params = [{transform_indices = @transform_0, window_bounds = array<i64: 16, 64>}, {pipeline_mode = #tpu.pipeline_mode<synchronous>, transform_indices = @transform_1, window_bounds = array<i64: 64, 32>}, {pipeline_mode = #tpu.pipeline_mode<synchronous>, transform_indices = @transform_2, window_bounds = array<i64: 8, 32>}, {transform_indices = @transform_3, window_bounds = array<i64: 16, 32>}]} {
    %c0 = arith.constant 0 : index
    %c0_0 = arith.constant 0 : index
    %0 = vector.load %arg1[%c0, %c0_0] : memref<16x64xbf16, #tpu.memory_space<vmem>>, vector<16x64xbf16>
    %c0_1 = arith.constant 0 : index
    %c0_2 = arith.constant 0 : index
    %1 = vector.load %arg2[%c0_1, %c0_2] : memref<64x32xbf16, #tpu.memory_space<vmem>>, vector<64x32xbf16>
    %cst = arith.constant dense<0.000000e+00> : vector<16x32xf32>
    %2 = tpu.matmul %0, %1, %cst {dimension_numbers = #tpu.dot_dimension_numbers<[1], [0], [0], [1], [0, 0, 1, 1], [], []>} : vector<16x64xbf16>, vector<64x32xbf16>, vector<16x32xf32> -> vector<16x32xf32>
    %c0_3 = arith.constant 0 : index
    %c0_4 = arith.constant 0 : index
    %3 = vector.load %arg3[%c0_3, %c0_4] : memref<8x32xf32, #tpu.memory_space<vmem>>, vector<8x32xf32>
    %4 = vector.extract_strided_slice %3 {offsets = [0, 0], sizes = [1, 32], strides = [1, 1]} : vector<8x32xf32> to vector<1x32xf32>
    %5 = vector.extract_strided_slice %3 {offsets = [1, 0], sizes = [1, 32], strides = [1, 1]} : vector<8x32xf32> to vector<1x32xf32>
    %6 = vector.extract_strided_slice %3 {offsets = [2, 0], sizes = [1, 32], strides = [1, 1]} : vector<8x32xf32> to vector<1x32xf32>
    %7 = vector.broadcast %4 : vector<1x32xf32> to vector<16x32xf32>
    %8 = arith.addf %2, %7 : vector<16x32xf32>
    %cst_5 = arith.constant dense<0.000000e+00> : vector<16xf32>
    %9 = vector.multi_reduction <add>, %8, %cst_5 [1] : vector<16x32xf32> to vector<16xf32>
    %10 = vector.shape_cast %9 : vector<16xf32> to vector<16x1xf32>
    %cst_6 = arith.constant 3.200000e+01 : f32
    %11 = vector.broadcast %cst_6 : f32 to vector<16x1xf32>
    %12 = arith.divf %10, %11 : vector<16x1xf32>
    %13 = arith.mulf %8, %8 : vector<16x32xf32>
    %cst_7 = arith.constant dense<0.000000e+00> : vector<16xf32>
    %14 = vector.multi_reduction <add>, %13, %cst_7 [1] : vector<16x32xf32> to vector<16xf32>
    %15 = vector.shape_cast %14 : vector<16xf32> to vector<16x1xf32>
    %cst_8 = arith.constant 3.200000e+01 : f32
    %16 = vector.broadcast %cst_8 : f32 to vector<16x1xf32>
    %17 = arith.divf %15, %16 : vector<16x1xf32>
    %18 = arith.mulf %12, %12 : vector<16x1xf32>
    %19 = arith.subf %17, %18 : vector<16x1xf32>
    %cst_9 = arith.constant 9.99999974E-6 : f32
    %20 = vector.broadcast %cst_9 : f32 to vector<16x1xf32>
    %21 = arith.addf %19, %20 : vector<16x1xf32>
    %22 = math.rsqrt %21 : vector<16x1xf32>
    %23 = vector.broadcast %5 : vector<1x32xf32> to vector<16x32xf32>
    %24 = vector.broadcast %22 : vector<16x1xf32> to vector<16x32xf32>
    %25 = arith.mulf %23, %24 : vector<16x32xf32>
    %26 = vector.broadcast %12 : vector<16x1xf32> to vector<16x32xf32>
    %27 = arith.mulf %26, %25 : vector<16x32xf32>
    %28 = vector.broadcast %6 : vector<1x32xf32> to vector<16x32xf32>
    %29 = arith.subf %28, %27 : vector<16x32xf32>
    %30 = arith.mulf %8, %25 : vector<16x32xf32>
    %31 = arith.addf %30, %29 : vector<16x32xf32>
    %32 = arith.truncf %31 : vector<16x32xf32> to vector<16x32xbf16>
    %c0_10 = arith.constant 0 : index
    %c0_11 = arith.constant 0 : index
    %33 = vector.load %arg4[%c0_10, %c0_11] : memref<16x32xbf16, #tpu.memory_space<vmem>>, vector<16x32xbf16>
    tpu.vector_store %arg4[%c0_10, %c0_11], %32 {strides = array<i32>} : memref<16x32xbf16, #tpu.memory_space<vmem>>, vector<16x32xbf16>,
    return
  }
  func.func @transform_0(%arg0: i32) -> (i32, i32) {
    %c0_i32 = arith.constant 0 : i32
    %c0_i32_0 = arith.constant 0 : i32
    return %arg0, %c0_i32 : i32, i32
  }
  func.func @transform_1(%arg0: i32) -> (i32, i32) {
    %c0_i32 = arith.constant 0 : i32
    %c0_i32_0 = arith.constant 0 : i32
    %c0_i32_1 = arith.constant 0 : i32
    return %c0_i32, %c0_i32_0 : i32, i32
  }
  func.func @transform_2(%arg0: i32) -> (i32, i32) {
    %c0_i32 = arith.constant 0 : i32
    %c0_i32_0 = arith.constant 0 : i32
    %c0_i32_1 = arith.constant 0 : i32
    return %c0_i32, %c0_i32_0 : i32, i32
  }
  func.func @transform_3(%arg0: i32) -> (i32, i32) {
    %c0_i32 = arith.constant 0 : i32
    %c0_i32_0 = arith.constant 0 : i32
    return %arg0, %c0_i32 : i32, i32
  }
}

</mosaic_0001>

<llo_original>
// kernel: patch_embedding.1
$region0: #{patch_embedding.1}
  #allocation0 [shape = 'u32[]', space=smem, size = 0x4, offset = 0x4, fixed_abs, tag = 'smem constant byte address 0x4 - core index']
  #allocation1 [shape = 'u32[144,128]{1,0:T(1,128)}', space=vmem, size = 0x12000, scoped, tag = 'internal scratch']
  %s0 = inlined_call_operand.vmem [shape: bf16[32,64], index: 0, kind: input, shape index: {}]
  %s1 = inlined_call_operand.vmem [shape: bf16[64,32], index: 1, kind: input, shape index: {}]
  %s2 = inlined_call_operand.vmem [shape: f32[8,32], index: 2, kind: input, shape index: {}]
  %s3 = inlined_call_operand.hbm [shape: bf16[32,32], index: 3, kind: output, shape index: {}]
  %s4 = sld [smem:[#allocation0]]
  $region45: #{patch_embedding.1} parent=0
    _
  %s6 = ssub.s32 1, %s4
  %s7 = scalar_select 0, %s6, %s4
  $region1: #{patch_embedding.1} parent=0
    #allocation2 [shape = 'u8[8192]{0}', space=vmem, size = 0x2000, scoped, tag = 'output window, operand 0']
    #allocation3 [shape = 's32[2]{0}', space=sflag, size = 0x8, scoped, tag = 'scoped memory for patch_embedding.1']
    %8 = vsyncpa [#allocation3], 0
    %s9 = scalar_lea.sflag [#allocation3], 1
    %10 = vsyncpa %s9, 0
    loop: start=0, step=1, limit=4
    $region2: #{patch_embedding.1} parent=1 // loop_pre_header
      _
    $region3: #{patch_embedding.1} parent=1 // loop_header
      %s12 = sphi 0, %s16
      %p13 = scmp.ge.s32.totalorder %s12, 4
      %s22 = sphi 0, %s24
      %s25 = sphi 0, %s22
      %s26 = sphi 0, %s25
      %s42 = sphi 0, %s26
      %s46 = sphi 0, %s46
      %s48 = sphi 0, %s46
      %s49 = sphi 0, %s48
      %s63 = sphi 0, %s49
      %s67 = sphi 0, %s67
      %s69 = sphi 0, %s67
      %s70 = sphi 0, %s69
      %s84 = sphi 0, %s70
      %s90 = sphi 0, %s92
      %s93 = sphi 0, %s90
      %s94 = sphi 0, %s93
      %s110 = sphi 0, %s94
    $region4: #{patch_embedding.1} parent=1 // loop_header_branch
      %15 = sbr.rel (%p13) target = $region8
    $region5: #{patch_embedding.1} parent=1 // loop_body
      %s17 = ssub.s32 %s12, 1
      %s18 = ssub.s32 %s12, 2
      %s19 = sadd.s32 %s12, 1
      %s20 = ssub.s32 %s12, %s19
      %p21 = scmp.eq.s32.totalorder %s20, 0
      %s23 = sadd.s32 %s22, 1
      %s24 = scalar_select %p21, %s22, %s23
      %p27 = pneg %p21
      %p28 = scmp.eq.s32.totalorder %s12, 1
      %p29 = por %p27, %p28
      %p30 = scmp.ne.s32.totalorder %s22, %s25
      %p31 = scmp.eq.s32.totalorder %s12, 0
      %p32 = por %p30, %p31
      %p33 = scmp.ne.s32.totalorder %s22, %s25
      %p34 = scmp.eq.s32.totalorder %s17, 1
      %p35 = por %p33, %p34
      %p36 = scmp.ne.s32.totalorder %s25, %s26
      %p37 = scmp.eq.s32.totalorder %s17, 0
      %p38 = por %p36, %p37
      %p39 = scmp.ne.s32.totalorder %s25, %s26
      %p40 = scmp.eq.s32.totalorder %s18, 1
      %p41 = por %p39, %p40
      %p43 = scmp.ne.s32.totalorder %s26, %s42
      %p44 = scmp.eq.s32.totalorder %s18, 0
      %p45 = por %p43, %p44
      %s47 = sadd.s32 %s46, 1
      %p50 = scmp.eq.s32.totalorder %s12, 1
      %p51 = scmp.ne.s32.totalorder %s46, %s48
      %p52 = scmp.eq.s32.totalorder %s12, 0
      %p53 = por %p51, %p52
      %p54 = scmp.ne.s32.totalorder %s46, %s48
      %p55 = scmp.eq.s32.totalorder %s17, 1
      %p56 = por %p54, %p55
      %p57 = scmp.ne.s32.totalorder %s48, %s49
      %p58 = scmp.eq.s32.totalorder %s17, 0
      %p59 = por %p57, %p58
      %p60 = scmp.ne.s32.totalorder %s48, %s49
      %p61 = scmp.eq.s32.totalorder %s18, 1
      %p62 = por %p60, %p61
      %p64 = scmp.ne.s32.totalorder %s49, %s63
      %p65 = scmp.eq.s32.totalorder %s18, 0
      %p66 = por %p64, %p65
      %s68 = sadd.s32 %s67, 1
      %p71 = scmp.eq.s32.totalorder %s12, 1
      %p72 = scmp.ne.s32.totalorder %s67, %s69
      %p73 = scmp.eq.s32.totalorder %s12, 0
      %p74 = por %p72, %p73
      %p75 = scmp.ne.s32.totalorder %s67, %s69
      %p76 = scmp.eq.s32.totalorder %s17, 1
      %p77 = por %p75, %p76
      %p78 = scmp.ne.s32.totalorder %s69, %s70
      %p79 = scmp.eq.s32.totalorder %s17, 0
      %p80 = por %p78, %p79
      %p81 = scmp.ne.s32.totalorder %s69, %s70
      %p82 = scmp.eq.s32.totalorder %s18, 1
      %p83 = por %p81, %p82
      %p85 = scmp.ne.s32.totalorder %s70, %s84
      %p86 = scmp.eq.s32.totalorder %s18, 0
      %p87 = por %p85, %p86
      %s88 = ssub.s32 %s12, %s19
      %p89 = scmp.eq.s32.totalorder %s88, 0
      %s91 = sadd.s32 %s90, 1
      %s92 = scalar_select %p89, %s90, %s91
      %p95 = pneg %p89
      %p96 = scmp.eq.s32.totalorder %s12, 1
      %p97 = por %p95, %p96
      %p98 = scmp.ne.s32.totalorder %s90, %s93
      %p99 = scmp.eq.s32.totalorder %s12, 0
      %p100 = por %p98, %p99
      %p101 = scmp.ne.s32.totalorder %s90, %s93
      %p102 = scmp.eq.s32.totalorder %s17, 1
      %p103 = por %p101, %p102
      %p104 = scmp.ne.s32.totalorder %s93, %s94
      %p105 = scmp.eq.s32.totalorder %s17, 0
      %p106 = por %p104, %p105
      %p107 = scmp.ne.s32.totalorder %s93, %s94
      %p108 = scmp.eq.s32.totalorder %s18, 1
      %p109 = por %p107, %p108
      %p111 = scmp.ne.s32.totalorder %s94, %s110
      %p112 = scmp.eq.s32.totalorder %s18, 0
      %p113 = por %p111, %p112
      %p114 = scmp.le.s32.totalorder 1, %s12
      %p115 = scmp.lt.s32.totalorder %s12, 3
      %p116 = pnand %p114, %p115
      %p117 = pneg %p116
      // Predicated region
      $region9: #{patch_embedding.1} parent=5 // pred_check
        _
      $region10: #{patch_embedding.1} parent=5 // pred_check_branch
        %119 = sbr.rel (%p116) target = $region12
      $region11: #{patch_embedding.1} parent=5 // pred_region
        %s120 = ssub.s32 %s12, 1
        // Predicated region
        $region13: #{patch_embedding.1} parent=11 // pred_check
          %p121 = pneg %p59
        $region14: #{patch_embedding.1} parent=11 // pred_check_branch
          %123 = sbr.rel (%p121) target = $region16
        $region15: #{patch_embedding.1} parent=11 // pred_region
          _
        $region16: #{patch_embedding.1} parent=11 // pred_fallthru
          _
        // Predicated region
        $region17: #{patch_embedding.1} parent=11 // pred_check
          %p124 = pneg %p80
        $region18: #{patch_embedding.1} parent=11 // pred_check_branch
          %126 = sbr.rel (%p124) target = $region20
        $region19: #{patch_embedding.1} parent=11 // pred_region
          _
        $region20: #{patch_embedding.1} parent=11 // pred_fallthru
          _
      $region12: #{patch_embedding.1} parent=5 // pred_fallthru
        _
      %p127 = scmp.lt.s32.totalorder %s12, 2
      // Predicated region
      $region21: #{patch_embedding.1} parent=5 // pred_check
        %p128 = pneg %p127
      $region22: #{patch_embedding.1} parent=5 // pred_check_branch
        %130 = sbr.rel (%p128) target = $region24
      $region23: #{patch_embedding.1} parent=5 // pred_region
        // Predicated region
        $region25: #{patch_embedding.1} parent=23 // pred_check
          %p131 = pneg %p32
        $region26: #{patch_embedding.1} parent=23 // pred_check_branch
          %133 = sbr.rel (%p131) target = $region28
        $region27: #{patch_embedding.1} parent=23 // pred_region
          %s134 = smul.u32 2, %s12
          %p135 = scmp.lt.s32.totalorder %s134, 3
          %s136 = scalar_select %p135, %s134, 3
          %s137 = smul.addr %s136, 4
          %s138 = scalar_lea.vmem %s0, %s137
          %s139 = smul.u32 2, %s12
        $region28: #{patch_embedding.1} parent=23 // pred_fallthru
          _
      $region24: #{patch_embedding.1} parent=5 // pred_fallthru
        _
      %p140 = scmp.le.s32.totalorder 1, %s12
      %p141 = scmp.lt.s32.totalorder %s12, 3
      %p142 = pnand %p140, %p141
      %p143 = pneg %p142
      // Predicated region
      $region29: #{patch_embedding.1} parent=5 // pred_check
        _
      $region30: #{patch_embedding.1} parent=5 // pred_check_branch
        %145 = sbr.rel (%p142) target = $region32
      $region31: #{patch_embedding.1} parent=5 // pred_region
        %s146 = ssub.s32 %s12, 1
        %s147 = smul.u32 2, %s17
        %p148 = scmp.lt.s32.totalorder %s147, 3
        %s149 = scalar_select %p148, %s147, 3
        %s150 = smul.addr %s149, 4
        %s151 = scalar_lea.vmem %s0, %s150
        %p152 = pneg %p38
        %p153 = pneg %p35
        %p154 = pneg %p59
        %p155 = pneg %p56
        %p156 = pneg %p80
        %p157 = pneg %p77
        %p158 = pneg %p106
        %p159 = pneg %p103
        %s160 = sand.u32 %s93, 1
        %s161 = scalar_lea.sflag [#allocation3], %s160
        %s162 = sand.u32 %s93, 1
        %s163 = smul.addr %s162, 8
        %s164 = scalar_lea.vmem [#allocation2], %s163
        %s165 = smul.u32 2, %s17
        %p166 = scmp.lt.s32.totalorder %s165, 3
        %s167 = scalar_select %p166, %s165, 3
        %s168 = smul.addr %s167, 4
        %s169 = scalar_lea.vmem %s0, %s168
        %s170 = smul.u32 2, %s17
        %s171 = smul.u32 2, %s17
        %v173 = vld [vmem:[%s169] sm:$0xf]
        %v174 = vld [vmem:[%s169 + $0x4] sm:$0xf]
        %v175 = vld [vmem:[%s1] sm:$0xf]
        %v176 = vld [vmem:[%s1 + $0x4] sm:$0xf]
        %v177 = vld [vmem:[%s1 + $0x8] sm:$0xf]
        %v178 = vld [vmem:[%s1 + $0xc] sm:$0xf]
        %v179 = vld [vmem:[%s1 + $0x10] sm:$0xf]
        %v180 = vld [vmem:[%s1 + $0x14] sm:$0xf]
        %v181 = vld [vmem:[%s1 + $0x18] sm:$0xf]
        %v182 = vld [vmem:[%s1 + $0x1c] sm:$0xf]
        %v183 = vld [vmem:[%s2] sm:$0xff]
        %v184 = vlaneseq
        %v185 = vshrl.u32 %v184, 7
        %v186 = vsub.s32 0, %v185
        %v187 = vrot.slane %v183, %v186
        %v190 = vunpack.c.l.b16 %v173
        %v191 = vunpack.c.l.b16 %v174
        %v192 = vpack.c.b16 %v191, %v190
        %v201 = vunpack.c.l.b16 %v175
        %v202 = vunpack.c.l.b16 %v176
        %v203 = vunpack.c.l.b16 %v177
        %v204 = vunpack.c.l.b16 %v178
        %v205 = vunpack.c.l.b16 %v179
        %v206 = vunpack.c.l.b16 %v180
        %v207 = vunpack.c.l.b16 %v181
        %v208 = vunpack.c.l.b16 %v182
        %v209 = vpack.c.b16 %v202, %v201
        %v210 = vpack.c.b16 %v204, %v203
        %v211 = vpack.c.b16 %v206, %v205
        %v212 = vpack.c.b16 %v208, %v207
        %vm217 = vcmask 523264
        %v219 = vsel %vm217, %v192, 0
        %221 = vmatprep.subr.bf16.mxu0 0
        %222 = vmatpush1.bf16.msra.mxu0 0
        %223 = vmatprep.subr.bf16.mxu0 0
        %224 = vmatpush1.bf16.msra.mxu0 0
        %225 = vmatprep.subr.bf16.mxu0 0
        %226 = vmatpush1.bf16.msra.mxu0 0
        %227 = vmatprep.subr.bf16.mxu0 0
        %228 = vmatpush1.bf16.msra.mxu0 0
        %229 = vmatprep.subr.bf16.mxu0 0
        %230 = vmatpush1.bf16.msra.mxu0 %v212
        %231 = vmatprep.subr.bf16.mxu0 0
        %232 = vmatpush1.bf16.msra.mxu0 %v211
        %233 = vmatprep.subr.bf16.mxu0 0
        %234 = vmatpush1.bf16.msra.mxu0 %v210
        %235 = vmatprep.subr.bf16.mxu0 0
        %236 = vmatpush1.bf16.msra.mxu0 %v209
        %237 = vmatprep.subr.bf16.mxu0 0
        %238 = vmatpush2.bf16.msra.mxu0 0
        %239 = vmatprep.subr.bf16.mxu0 0
        %240 = vmatpush2.bf16.msra.mxu0 0
        %241 = vmatprep.subr.bf16.mxu0 0
        %242 = vmatpush2.bf16.msra.mxu0 0
        %243 = vmatprep.subr.bf16.mxu0 0
        %244 = vmatpush2.bf16.msra.mxu0 0
        %245 = vmatprep.subr.bf16.mxu0 0
        %246 = vmatpush2.bf16.msra.mxu0 0
        %247 = vmatprep.subr.bf16.mxu0 0
        %248 = vmatpush2.bf16.msra.mxu0 0
        %249 = vmatprep.subr.bf16.mxu0 0
        %250 = vmatpush2.bf16.msra.mxu0 0
        %251 = vmatprep.subr.bf16.mxu0 0
        %252 = vmatpush2.bf16.msra.mxu0 0
        %253 = vmatprep.mubr.bf16.mxu0 0
        %254 = vmatmul.mubr.bf16.gmra.mxu0 %v219
        %v255 = vpop.f32.mrf.mxu0
        %v256 = vadd.f32 %v187, %v255
        %v257 = vpop.f32.mrf.mxu0
        %v258 = vpop.f32.mrf.mxu0
        %v259 = vadd.f32 %v187, %v258
        %v260 = vpop.f32.mrf.mxu0
        %261 = vdwg.mxu0
        %vm262 = vcmask 261120
        %v263 = vsel %vm262, %v256, 0.0
        %264 = vadd.xlane.f32.xlu0 %v263
        %v265 = vpop.xlane.xlu0 %264
        %v266 = vsel %vm262, %v259, 0.0
        %267 = vadd.xlane.f32.xlu0 %v266
        %v268 = vpop.xlane.xlu0 %267
        %v269 = vrcp.pop 32.0
        %v270 = vmul.f32 %v265, %v269
        %v271 = vmul.f32 %v268, %v269
        %v272 = vmul.f32 %v256, %v256
        %v273 = vmul.f32 %v259, %v259
        %v274 = vsel %vm262, %v272, 0.0
        %275 = vadd.xlane.f32.xlu0 %v274
        %v276 = vpop.xlane.xlu0 %275
        %v277 = vsel %vm262, %v273, 0.0
        %278 = vadd.xlane.f32.xlu0 %v277
        %v279 = vpop.xlane.xlu0 %278
        %v280 = vmul.f32 %v276, %v269
        %v281 = vmul.f32 %v279, %v269
        %v282 = vmul.f32 %v270, %v270
        %v283 = vmul.f32 %v271, %v271
        %v284 = vsub.f32 %v280, %v282
        %v285 = vsub.f32 %v281, %v283
        %v286 = vadd.f32 %v284, 1e-05
        %v287 = vadd.f32 %v285, 1e-05
        %v288 = vrsqrt.pop %v286
        %v289 = vrsqrt.pop %v287
        %v290 = vlaneseq
        %v291 = vshrl.u32 %v290, 7
        %v292 = vsub.s32 1, %v291
        %v293 = vrot.slane %v183, %v292
        %v294 = vmul.f32 %v293, %v288
        %v295 = vmul.f32 %v293, %v289
        %v296 = vmul.f32 %v270, %v294
        %v297 = vmul.f32 %v271, %v295
        %v298 = vlaneseq
        %v299 = vshrl.u32 %v298, 7
        %v300 = vsub.s32 2, %v299
        %v301 = vrot.slane %v183, %v300
        %v302 = vsub.f32 %v301, %v296
        %v303 = vsub.f32 %v301, %v297
        %v304 = vmul.f32 %v256, %v294
        %v305 = vmul.f32 %v259, %v295
        %v306 = vadd.f32 %v304, %v302
        %v307 = vadd.f32 %v305, %v303
        %v308 = vpack.c.bf16 %v307, %v306
        %v310 = vunpack.c.l.b16 %v308
        %v311 = vunpack.c.h.b16 %v308
        %v312 = vpack.c.b16 %v310, %v310
        %v313 = vpack.c.b16 %v311, %v311
        %vm316 = vcmask 257024
        %317 = vst.msk [vmem:[%s164] sm:$0xf] %vm316, %v312
        %318 = vst.msk [vmem:[%s164 + $0x4] sm:$0xf] %vm316, %v313
        %s319 = sand.u32 %s93, 1
        %s320 = scalar_lea.sflag [#allocation3], %s319
        %s321 = sand.u32 %s93, 1
        %s322 = smul.addr %s321, 8
        %s323 = scalar_lea.vmem [#allocation2], %s322
        // Predicated region
        $region33: #{patch_embedding.1} parent=31 // pred_check
          %p324 = pneg %p103
        $region34: #{patch_embedding.1} parent=31 // pred_check_branch
          %326 = sbr.rel (%p324) target = $region36
        $region35: #{patch_embedding.1} parent=31 // pred_region
          %s327 = smul.u32 2, %s17
          %s329 = ssub.s32 128, 128
          %330 = vsyncadd %s320, %s329
          %s331 = smul.addr %s327, 64
          %s332 = scalar_lea.hbm %s3, %s331
          %s333 = sshll.u32 %s323, 4
          %s334 = int_to_ptr.vmem [resolvable:$true] %s333
          %339 = dma.vmem_to_hbm [thread:$0]  %s334, 128, %s332, %s320, 64, 64, 4
        $region36: #{patch_embedding.1} parent=31 // pred_fallthru
          _
      $region32: #{patch_embedding.1} parent=5 // pred_fallthru
        _
      %p340 = scmp.le.s32.totalorder 2, %s12
      // Predicated region
      $region37: #{patch_embedding.1} parent=5 // pred_check
        %p341 = pneg %p340
      $region38: #{patch_embedding.1} parent=5 // pred_check_branch
        %343 = sbr.rel (%p341) target = $region40
      $region39: #{patch_embedding.1} parent=5 // pred_region
        %s344 = ssub.s32 %s12, 2
        // Predicated region
        $region41: #{patch_embedding.1} parent=39 // pred_check
          %p345 = pneg %p109
        $region42: #{patch_embedding.1} parent=39 // pred_check_branch
          %347 = sbr.rel (%p345) target = $region44
        $region43: #{patch_embedding.1} parent=39 // pred_region
          %s348 = sand.u32 %s94, 1
          %s349 = scalar_lea.sflag [#allocation3], %s348
          %s350 = sand.u32 %s94, 1
          %s351 = smul.addr %s350, 8
          %s352 = scalar_lea.vmem [#allocation2], %s351
          %353 = dma.done %s349, 128
        $region44: #{patch_embedding.1} parent=39 // pred_fallthru
          _
      $region40: #{patch_embedding.1} parent=5 // pred_fallthru
        _
    $region6: #{patch_embedding.1} parent=1 // loop_footer
      %s16 = sadd.s32 1, %s12
    $region7: #{patch_embedding.1} parent=1 // loop_footer_branch
      %11 = sbr.rel target = $region3
    $region8: #{patch_embedding.1} parent=1 // loop_exit
      _
    %354 = vsyncpa [#allocation3], 1
    %s355 = scalar_lea.sflag [#allocation3], 1
    %356 = vsyncpa %s355, 1

</llo_original>
